<compile_context>
chip_gen: v5e
topology: v5e:2x2
jax: 0.10.0
libtpu: 0.0.40
codegen_flags: <defaults>
</compile_context>

<pallas_src>
import functools

import jax
import jax.numpy as jnp
from jax.experimental import pallas as pl
from jax.experimental.pallas import tpu as pltpu

_LANES = 128      # vreg lane width: last-dim tiling unit
_SUBLANES = 8     # vreg sublane count: second-to-last-dim tiling unit
_TB_MAX = 1024    # max batch rows per grid step


def _round_up(n, m):
    return ((n + m - 1) // m) * m


def _cdiv(a, b):
    return -(-a // b)


def mlp_softmax_kernel(x_ref, w1_ref, b1_ref, w2_ref, b2_ref, o_ref):
    """One batch tile: out = softmax(relu(x @ W1 + b1) @ W2 + b2, axis=-1)."""
    # Layer 1: bf16 MXU operands, f32 accumulation; bias/ReLU in f32.
    h = jnp.dot(x_ref[...], w1_ref[...], preferred_element_type=jnp.float32)
    h = jnp.maximum(h + b1_ref[...], 0.0)

    # Layer 2. Padded output columns carry bias = -1e30 so exp() underflows to
    # 0 and the softmax over the real columns is unchanged.
    logits = jnp.dot(h.astype(jnp.bfloat16), w2_ref[...],
                     preferred_element_type=jnp.float32)
    logits = logits + b2_ref[...]

    # Softmax over last dim (f32). Reciprocal lowers to the EUP slot.
    m = jnp.max(logits, axis=-1, keepdims=True)
    e = jnp.exp(logits - m)
    denom = jnp.sum(e, axis=-1, keepdims=True)
    o_ref[...] = (e * pl.reciprocal(denom, approx=True)).astype(o_ref.dtype)


def prepare_params(w1, b1, w2, b2):
    """Pad feature dims to 128 lanes and cast weights to bf16 ONCE.

    Call once at network-construction time so the O(IN*H + H*OUT) pad/cast HBM
    passes are not repeated every forward call.

    Layout: w1 (IN, H), b1 (H,), w2 (H, OUT), b2 (OUT,) -- i.e. weights are the
    transpose of PyTorch nn.Linear's (out_features, in_features) storage.
    """
    IN, H = w1.shape
    H2, OUT = w2.shape
    assert H2 == H and b1.shape == (H,) and b2.shape == (OUT,)

    INP, HP, OUTP = (_round_up(d, _LANES) for d in (IN, H, OUT))

    # Pad the bf16 buffers directly (no padded-f32 intermediate).
    w1_bf = jnp.zeros((INP, HP), jnp.bfloat16).at[:IN, :H].set(
        w1.astype(jnp.bfloat16))
    w2_bf = jnp.zeros((HP, OUTP), jnp.bfloat16).at[:H, :OUT].set(
        w2.astype(jnp.bfloat16))
    b1_p = jnp.zeros((1, HP), jnp.float32).at[0, :H].set(b1.astype(jnp.float32))
    # Padded output columns: huge negative bias (f32) -> zero softmax weight.
    b2_p = jnp.full((1, OUTP), -1e30, jnp.float32).at[0, :OUT].set(
        b2.astype(jnp.float32))

    return (w1_bf, b1_p, w2_bf, b2_p), (IN, H, OUT)


@functools.partial(jax.jit, static_argnames=("in_features", "out_features"))
def _forward_padded(x, w1_bf, b1_p, w2_bf, b2_p, *, in_features, out_features):
    B = x.shape[0]
    assert x.shape[1] == in_features
    INP, HP = w1_bf.shape
    OUTP = w2_bf.shape[1]

    # ---- Batch tiling ----
    #  * tiles are multiples of 8 sublanes, at most _TB_MAX rows
    #  * >= 2 (even) tiles whenever B allows: both v7x TensorCores get work and
    #    v5e/v6e can pipeline x/out DMA against compute
    #  * TB ~= ceil(B8 / n_tiles): <=7 padded rows per tile, balanced tiles
    B8 = _round_up(B, _SUBLANES)
    n_tiles = max(1, _cdiv(B8, _TB_MAX))
    if B8 >= 2 * _SUBLANES:
        n_tiles = max(2, n_tiles)
        if n_tiles % 2:
            n_tiles += 1
    TB = _round_up(_cdiv(B8, n_tiles), _SUBLANES)
    n_tiles = _cdiv(B8, TB)
    B_pad = n_tiles * TB

    # ---- Pad the activation directly in bf16 (single HBM pass) ----
    if B_pad == B and INP == in_features:
        x_bf = x.astype(jnp.bfloat16)
    else:
        x_bf = jnp.zeros((B_pad, INP), jnp.bfloat16).at[:B, :in_features].set(
            x.astype(jnp.bfloat16))

    # ---- Explicit VMEM budget ----
    # x/out double-buffered, weights/biases single-buffered (see Buffered(1)).
    vmem_bytes = (
        2 * TB * INP * 2        # x tiles, bf16
        + 2 * TB * OUTP * 4     # out tiles, f32
        + INP * HP * 2          # W1 bf16 (1 buffer)
        + HP * OUTP * 2         # W2 bf16 (1 buffer)
        + 4 * (HP + OUTP)       # biases f32
    )
    # 2x headroom, 16 MiB floor, 60 MiB cap (safe on v7x's 64 MiB physical,
    # raises v5e's 16 MiB default scoped limit when layer dims grow).
    vmem_limit = int(min(max(2 * vmem_bytes, 16 * 2**20), 60 * 2**20))

    # Weights/biases never change across batch tiles: constant index_map keeps
    # them resident; Buffered(1) avoids allocating a useless second VMEM copy.
    resident = dict(pipeline_mode=pl.Buffered(1))

    out_p = pl.pallas_call(
        mlp_softmax_kernel,
        out_shape=jax.ShapeDtypeStruct((B_pad, OUTP), jnp.float32),
        grid=(n_tiles,),
        in_specs=[
            pl.BlockSpec((TB, INP), lambda i: (i, 0)),               # x tile
            pl.BlockSpec((INP, HP), lambda i: (0, 0), **resident),   # W1
            pl.BlockSpec((1, HP), lambda i: (0, 0), **resident),     # b1
            pl.BlockSpec((HP, OUTP), lambda i: (0, 0), **resident),  # W2
            pl.BlockSpec((1, OUTP), lambda i: (0, 0), **resident),   # b2
        ],
        out_specs=pl.BlockSpec((TB, OUTP), lambda i: (i, 0)),
        compiler_params=pltpu.CompilerParams(
            dimension_semantics=("parallel",),   # megacore-shardable batch axis
            vmem_limit_bytes=vmem_limit,
        ),
    )(x_bf, w1_bf, b1_p, w2_bf, b2_p)

    return out_p[:B, :out_features]


def network_forward(x, params, dims):
    """Forward pass of Network given prepare_params() output."""
    w1_bf, b1_p, w2_bf, b2_p = params
    IN, _, OUT = dims
    return _forward_padded(x, w1_bf, b1_p, w2_bf, b2_p,
                           in_features=IN, out_features=OUT)


def reference_forward(x, w1, b1, w2, b2):
    h = jnp.maximum(x @ w1 + b1, 0.0)
    logits = h @ w2 + b2
    return jax.nn.softmax(logits, axis=-1)


if __name__ == "__main__":
    key = jax.random.PRNGKey(0)
    B, IN, HID, OUT = 8, 32, 64, 16

    kx, k1, k2, k3, k4 = jax.random.split(key, 5)
    x = jax.random.normal(kx, (B, IN), dtype=jnp.float32)

    # Deterministic PyTorch-style init: U(-1/sqrt(fan_in), 1/sqrt(fan_in)).
    bound1 = 1.0 / jnp.sqrt(IN)
    bound2 = 1.0 / jnp.sqrt(HID)
    w1 = jax.random.uniform(k1, (IN, HID), jnp.float32, -bound1, bound1)
    b1 = jax.random.uniform(k2, (HID,), jnp.float32, -bound1, bound1)
    w2 = jax.random.uniform(k3, (HID, OUT), jnp.float32, -bound2, bound2)
    b2 = jax.random.uniform(k4, (OUT,), jnp.float32, -bound2, bound2)

    # Pad + cast the parameters once (hoisted out of the per-call path).
    params, dims = prepare_params(w1, b1, w2, b2)

    out = network_forward(x, params, dims)
    jax.block_until_ready(out)
    ref = reference_forward(x, w1, b1, w2, b2)
    assert out.shape == (B, OUT)
    # bf16 MXU operands + approx reciprocal -> loosened tolerance.
    assert jnp.allclose(out, ref, atol=2e-2, rtol=2e-2)
    # Softmax rows sum to ~1 (approx reciprocal ~1e-3 relative error).
    assert jnp.allclose(jnp.sum(out, axis=-1), 1.0, atol=5e-3)

    # Larger batch not near a tile multiple: exercises the balanced 2-tile
    # split (TB=152 for B=300 -> only 4 padded rows) and the parallel grid.
    B2 = 300
    x2 = jax.random.normal(jax.random.fold_in(kx, 1), (B2, IN), dtype=jnp.float32)
    out2 = network_forward(x2, params, dims)
    jax.block_until_ready(out2)
    ref2 = reference_forward(x2, w1, b1, w2, b2)
    assert out2.shape == (B2, OUT)
    assert jnp.allclose(out2, ref2, atol=2e-2, rtol=2e-2)
    assert jnp.allclose(jnp.sum(out2, axis=-1), 1.0, atol=5e-3)

    print("KERNEL_OK")
</pallas_src>

<mosaic_0001>
module attributes {stable_mosaic.version = 11 : i64} {
  func.func @mlp_softmax_kernel(%arg0: i32, %arg1: memref<8x128xbf16, #tpu.memory_space<vmem>>, %arg2: memref<128x128xbf16, #tpu.memory_space<vmem>>, %arg3: memref<1x128xf32, #tpu.memory_space<vmem>>, %arg4: memref<128x128xbf16, #tpu.memory_space<vmem>>, %arg5: memref<1x128xf32, #tpu.memory_space<vmem>>, %arg6: memref<8x128xf32, #tpu.memory_space<vmem>>) attributes {dimension_semantics = [#tpu.dimension_semantics<parallel>], iteration_bounds = array<i64: 1>, scalar_prefetch = 0 : i64, scratch_operands = 0 : i64, tpu.core_type = #tpu.core_type<tc>, window_params = [{transform_indices = @transform_0, window_bounds = array<i64: 8, 128>}, {pipeline_mode = #tpu.pipeline_mode<synchronous>, transform_indices = @transform_1, window_bounds = array<i64: 128, 128>}, {pipeline_mode = #tpu.pipeline_mode<synchronous>, transform_indices = @transform_2, window_bounds = array<i64: 1, 128>}, {pipeline_mode = #tpu.pipeline_mode<synchronous>, transform_indices = @transform_3, window_bounds = array<i64: 128, 128>}, {pipeline_mode = #tpu.pipeline_mode<synchronous>, transform_indices = @transform_4, window_bounds = array<i64: 1, 128>}, {transform_indices = @transform_5, window_bounds = array<i64: 8, 128>}]} {
    %c0 = arith.constant 0 : index
    %c0_0 = arith.constant 0 : index
    %0 = vector.load %arg1[%c0, %c0_0] : memref<8x128xbf16, #tpu.memory_space<vmem>>, vector<8x128xbf16>
    %c0_1 = arith.constant 0 : index
    %c0_2 = arith.constant 0 : index
    %1 = vector.load %arg2[%c0_1, %c0_2] : memref<128x128xbf16, #tpu.memory_space<vmem>>, vector<128x128xbf16>
    %cst = arith.constant dense<0.000000e+00> : vector<8x128xf32>
    %2 = tpu.matmul %0, %1, %cst {dimension_numbers = #tpu.dot_dimension_numbers<[1], [0], [0], [1], [0, 0, 1, 1], [], []>} : vector<8x128xbf16>, vector<128x128xbf16>, vector<8x128xf32> -> vector<8x128xf32>
    %c0_3 = arith.constant 0 : index
    %c0_4 = arith.constant 0 : index
    %3 = vector.load %arg3[%c0_3, %c0_4] : memref<1x128xf32, #tpu.memory_space<vmem>>, vector<1x128xf32>
    %4 = vector.broadcast %3 : vector<1x128xf32> to vector<8x128xf32>
    %5 = arith.addf %2, %4 : vector<8x128xf32>
    %cst_5 = arith.constant 0.000000e+00 : f32
    %6 = vector.broadcast %cst_5 : f32 to vector<8x128xf32>
    %7 = arith.maximumf %5, %6 : vector<8x128xf32>
    %8 = arith.truncf %7 : vector<8x128xf32> to vector<8x128xbf16>
    %c0_6 = arith.constant 0 : index
    %c0_7 = arith.constant 0 : index
    %9 = vector.load %arg4[%c0_6, %c0_7] : memref<128x128xbf16, #tpu.memory_space<vmem>>, vector<128x128xbf16>
    %cst_8 = arith.constant dense<0.000000e+00> : vector<8x128xf32>
    %10 = tpu.matmul %8, %9, %cst_8 {dimension_numbers = #tpu.dot_dimension_numbers<[1], [0], [0], [1], [0, 0, 1, 1], [], []>} : vector<8x128xbf16>, vector<128x128xbf16>, vector<8x128xf32> -> vector<8x128xf32>
    %c0_9 = arith.constant 0 : index
    %c0_10 = arith.constant 0 : index
    %11 = vector.load %arg5[%c0_9, %c0_10] : memref<1x128xf32, #tpu.memory_space<vmem>>, vector<1x128xf32>
    %12 = vector.broadcast %11 : vector<1x128xf32> to vector<8x128xf32>
    %13 = arith.addf %10, %12 : vector<8x128xf32>
    %cst_11 = arith.constant dense<0xFF800000> : vector<8xf32>
    %14 = vector.multi_reduction <maximumf>, %13, %cst_11 [1] : vector<8x128xf32> to vector<8xf32>
    %15 = vector.shape_cast %14 : vector<8xf32> to vector<8x1xf32>
    %16 = vector.broadcast %15 : vector<8x1xf32> to vector<8x128xf32>
    %17 = arith.subf %13, %16 : vector<8x128xf32>
    %18 = math.exp %17 : vector<8x128xf32>
    %cst_12 = arith.constant dense<0.000000e+00> : vector<8xf32>
    %19 = vector.multi_reduction <add>, %18, %cst_12 [1] : vector<8x128xf32> to vector<8xf32>
    %20 = vector.shape_cast %19 : vector<8xf32> to vector<8x1xf32>
    %21 = tpu.reciprocal %20 {approx = true} : vector<8x1xf32> -> vector<8x1xf32>
    %22 = vector.broadcast %21 : vector<8x1xf32> to vector<8x128xf32>
    %23 = arith.mulf %18, %22 : vector<8x128xf32>
    %c0_13 = arith.constant 0 : index
    %c0_14 = arith.constant 0 : index
    %24 = vector.load %arg6[%c0_13, %c0_14] : memref<8x128xf32, #tpu.memory_space<vmem>>, vector<8x128xf32>
    tpu.vector_store %arg6[%c0_13, %c0_14], %23 {strides = array<i32>} : memref<8x128xf32, #tpu.memory_space<vmem>>, vector<8x128xf32>,
    return
  }
  func.func @transform_0(%arg0: i32) -> (i32, i32) {
    %c0_i32 = arith.constant 0 : i32
    %c0_i32_0 = arith.constant 0 : i32
    return %arg0, %c0_i32 : i32, i32
  }
  func.func @transform_1(%arg0: i32) -> (i32, i32) {
    %c0_i32 = arith.constant 0 : i32
    %c0_i32_0 = arith.constant 0 : i32
    %c0_i32_1 = arith.constant 0 : i32
    return %c0_i32, %c0_i32_0 : i32, i32
  }
  func.func @transform_2(%arg0: i32) -> (i32, i32) {
    %c0_i32 = arith.constant 0 : i32
    %c0_i32_0 = arith.constant 0 : i32
    %c0_i32_1 = arith.constant 0 : i32
    return %c0_i32, %c0_i32_0 : i32, i32
  }
  func.func @transform_3(%arg0: i32) -> (i32, i32) {
    %c0_i32 = arith.constant 0 : i32
    %c0_i32_0 = arith.constant 0 : i32
    %c0_i32_1 = arith.constant 0 : i32
    return %c0_i32, %c0_i32_0 : i32, i32
  }
  func.func @transform_4(%arg0: i32) -> (i32, i32) {
    %c0_i32 = arith.constant 0 : i32
    %c0_i32_0 = arith.constant 0 : i32
    %c0_i32_1 = arith.constant 0 : i32
    return %c0_i32, %c0_i32_0 : i32, i32
  }
  func.func @transform_5(%arg0: i32) -> (i32, i32) {
    %c0_i32 = arith.constant 0 : i32
    %c0_i32_0 = arith.constant 0 : i32
    return %arg0, %c0_i32 : i32, i32
  }
}

</mosaic_0001>

<llo_original>
// kernel: _forward_padded.1
$region0: #{_forward_padded.1}
  #allocation0 [shape = 'u32[]', space=smem, size = 0x4, offset = 0x4, fixed_abs, tag = 'smem constant byte address 0x4 - core index']
  #allocation1 [shape = 'u32[72,128]{1,0:T(1,128)}', space=vmem, size = 0x9000, scoped, tag = 'internal scratch']
  %s0 = inlined_call_operand.vmem [shape: bf16[8,128], index: 0, kind: input, shape index: {}]
  %s1 = inlined_call_operand.hbm [shape: bf16[128,128], index: 1, kind: input, shape index: {}]
  %s2 = inlined_call_operand.vmem [shape: f32[1,128], index: 2, kind: input, shape index: {}]
  %s3 = inlined_call_operand.hbm [shape: bf16[128,128], index: 3, kind: input, shape index: {}]
  %s4 = inlined_call_operand.vmem [shape: f32[1,128], index: 4, kind: input, shape index: {}]
  %s5 = inlined_call_operand.hbm [shape: f32[8,128], index: 5, kind: output, shape index: {}]
  %s6 = sld [smem:[#allocation0]]
  $region38: #{_forward_padded.1} parent=0
    _
  %s8 = ssub.s32 1, %s6
  %s9 = scalar_select 0, %s8, %s6
  $region1: #{_forward_padded.1} parent=0
    #allocation2 [shape = 'u8[32768]{0}', space=vmem, size = 0x8000, scoped, tag = 'input window, operand 1, single buffered']
    #allocation3 [shape = 's32[1]{0}', space=sflag, size = 0x4, scoped, tag = 'scoped memory for _forward_padded.1']
    #allocation4 [shape = 's32[1]{0}', space=sflag, size = 0x4, scoped, tag = 'scoped memory for _forward_padded.1']
    #allocation5 [shape = 'u8[32768]{0}', space=vmem, size = 0x8000, scoped, tag = 'input window, operand 3, single buffered']
    #allocation6 [shape = 's32[1]{0}', space=sflag, size = 0x4, scoped, tag = 'scoped memory for _forward_padded.1']
    #allocation7 [shape = 'u8[4096]{0}', space=vmem, size = 0x1000, scoped, tag = 'output window, operand 0, single buffered']
    %10 = vsyncpa [#allocation3], 0
    %11 = vsyncpa [#allocation6], 0
    %12 = vsyncpa [#allocation4], 0
    // Predicated region
    $region2: #{_forward_padded.1} parent=1 // pred_check
      _
    $region3: #{_forward_padded.1} parent=1 // pred_check_branch
      %14 = sbr.rel (0) target = $region5
    $region4: #{_forward_padded.1} parent=1 // pred_region
      _
    $region5: #{_forward_padded.1} parent=1 // pred_fallthru
      _
    // Predicated region
    $region6: #{_forward_padded.1} parent=1 // pred_check
      _
    $region7: #{_forward_padded.1} parent=1 // pred_check_branch
      %16 = sbr.rel (0) target = $region9
    $region8: #{_forward_padded.1} parent=1 // pred_region
      %18 = vsyncadd [#allocation3], 0
      %s19 = sshll.u32 %s1, 4
      %s20 = int_to_ptr.hbm [resolvable:$true] %s19
      %s21 = sshll.u32 [#allocation2], 4
      %s22 = int_to_ptr.vmem [resolvable:$true] %s21
      %27 = dma.hbm_to_vmem [thread:$0]  %s20, 1024, %s22, [#allocation3], 64, 64, 4
    $region9: #{_forward_padded.1} parent=1 // pred_fallthru
      _
    // Predicated region
    $region10: #{_forward_padded.1} parent=1 // pred_check
      _
    $region11: #{_forward_padded.1} parent=1 // pred_check_branch
      %29 = sbr.rel (0) target = $region13
    $region12: #{_forward_padded.1} parent=1 // pred_region
      _
    $region13: #{_forward_padded.1} parent=1 // pred_fallthru
      _
    // Predicated region
    $region14: #{_forward_padded.1} parent=1 // pred_check
      _
    $region15: #{_forward_padded.1} parent=1 // pred_check_branch
      %31 = sbr.rel (0) target = $region17
    $region16: #{_forward_padded.1} parent=1 // pred_region
      %33 = vsyncadd [#allocation6], 0
      %s34 = sshll.u32 %s3, 4
      %s35 = int_to_ptr.hbm [resolvable:$true] %s34
      %s36 = sshll.u32 [#allocation5], 4
      %s37 = int_to_ptr.vmem [resolvable:$true] %s36
      %42 = dma.hbm_to_vmem [thread:$0]  %s35, 1024, %s37, [#allocation6], 64, 64, 4
    $region17: #{_forward_padded.1} parent=1 // pred_fallthru
      _
    // Predicated region
    $region18: #{_forward_padded.1} parent=1 // pred_check
      _
    $region19: #{_forward_padded.1} parent=1 // pred_check_branch
      %44 = sbr.rel (0) target = $region21
    $region20: #{_forward_padded.1} parent=1 // pred_region
      _
    $region21: #{_forward_padded.1} parent=1 // pred_fallthru
      _
    // Predicated region
    $region22: #{_forward_padded.1} parent=1 // pred_check
      _
    $region23: #{_forward_padded.1} parent=1 // pred_check_branch
      %46 = sbr.rel (0) target = $region25
    $region24: #{_forward_padded.1} parent=1 // pred_region
      %48 = dma.done [#allocation3], 1024
    $region25: #{_forward_padded.1} parent=1 // pred_fallthru
      _
    // Predicated region
    $region26: #{_forward_padded.1} parent=1 // pred_check
      _
    $region27: #{_forward_padded.1} parent=1 // pred_check_branch
      %50 = sbr.rel (0) target = $region29
    $region28: #{_forward_padded.1} parent=1 // pred_region
      %52 = dma.done [#allocation6], 1024
    $region29: #{_forward_padded.1} parent=1 // pred_fallthru
      _
    %v53 = vld [vmem:[%s0] sm:$0xf]
    %v54 = vld [vmem:[#allocation2] sm:$0xf]
    %v55 = vld [vmem:[#allocation2 + $0x4] sm:$0xf]
    %v56 = vld [vmem:[#allocation2 + $0x8] sm:$0xf]
    %v57 = vld [vmem:[#allocation2 + $0xc] sm:$0xf]
    %v58 = vld [vmem:[#allocation2 + $0x10] sm:$0xf]
    %v59 = vld [vmem:[#allocation2 + $0x14] sm:$0xf]
    %v60 = vld [vmem:[#allocation2 + $0x18] sm:$0xf]
    %v61 = vld [vmem:[#allocation2 + $0x1c] sm:$0xf]
    %v62 = vld [vmem:[#allocation2 + $0x20] sm:$0xf]
    %v63 = vld [vmem:[#allocation2 + $0x24] sm:$0xf]
    %v64 = vld [vmem:[#allocation2 + $0x28] sm:$0xf]
    %v65 = vld [vmem:[#allocation2 + $0x2c] sm:$0xf]
    %v66 = vld [vmem:[#allocation2 + $0x30] sm:$0xf]
    %v67 = vld [vmem:[#allocation2 + $0x34] sm:$0xf]
    %v68 = vld [vmem:[#allocation2 + $0x38] sm:$0xf]
    %v69 = vld [vmem:[#allocation2 + $0x3c] sm:$0xf]
    %v70 = vld [vmem:[%s2] sm:$0x1]
    %v72 = vperm.slane %v70, 0
    %v90 = vunpack.c.l.b16 %v54
    %v91 = vunpack.c.l.b16 %v55
    %v92 = vunpack.c.l.b16 %v56
    %v93 = vunpack.c.l.b16 %v57
    %v94 = vunpack.c.l.b16 %v58
    %v95 = vunpack.c.l.b16 %v59
    %v96 = vunpack.c.l.b16 %v60
    %v97 = vunpack.c.l.b16 %v61
    %v98 = vunpack.c.l.b16 %v62
    %v99 = vunpack.c.l.b16 %v63
    %v100 = vunpack.c.l.b16 %v64
    %v101 = vunpack.c.l.b16 %v65
    %v102 = vunpack.c.l.b16 %v66
    %v103 = vunpack.c.l.b16 %v67
    %v104 = vunpack.c.l.b16 %v68
    %v105 = vunpack.c.l.b16 %v69
    %v106 = vpack.c.b16 %v91, %v90
    %v107 = vpack.c.b16 %v93, %v92
    %v108 = vpack.c.b16 %v95, %v94
    %v109 = vpack.c.b16 %v97, %v96
    %v110 = vpack.c.b16 %v99, %v98
    %v111 = vpack.c.b16 %v101, %v100
    %v112 = vpack.c.b16 %v103, %v102
    %v113 = vpack.c.b16 %v105, %v104
    %122 = vmatpush.bf16.msra.mxu0 %v113
    %123 = vmatpush.bf16.msra.mxu0 %v112
    %124 = vmatpush.bf16.msra.mxu0 %v111
    %125 = vmatpush.bf16.msra.mxu0 %v110
    %126 = vmatpush.bf16.msra.mxu0 %v109
    %127 = vmatpush.bf16.msra.mxu0 %v108
    %128 = vmatpush.bf16.msra.mxu0 %v107
    %129 = vmatpush.bf16.msra.mxu0 %v106
    %130 = vmatmul.bf16.gmra.mxu0 %v53
    %v131 = vpop.f32.mrf.mxu0
    %v132 = vadd.f32 %v72, %v131
    %v133 = vpop.f32.mrf.mxu0
    %134 = vdwg.mxu0
    %v135 = vmax.f32 %v132, 0.0
    %v136 = vpack.c.bf16 %v135, %v135
    %v137 = vld [vmem:[#allocation5] sm:$0xf]
    %v138 = vld [vmem:[#allocation5 + $0x4] sm:$0xf]
    %v139 = vld [vmem:[#allocation5 + $0x8] sm:$0xf]
    %v140 = vld [vmem:[#allocation5 + $0xc] sm:$0xf]
    %v141 = vld [vmem:[#allocation5 + $0x10] sm:$0xf]
    %v142 = vld [vmem:[#allocation5 + $0x14] sm:$0xf]
    %v143 = vld [vmem:[#allocation5 + $0x18] sm:$0xf]
    %v144 = vld [vmem:[#allocation5 + $0x1c] sm:$0xf]
    %v145 = vld [vmem:[#allocation5 + $0x20] sm:$0xf]
    %v146 = vld [vmem:[#allocation5 + $0x24] sm:$0xf]
    %v147 = vld [vmem:[#allocation5 + $0x28] sm:$0xf]
    %v148 = vld [vmem:[#allocation5 + $0x2c] sm:$0xf]
    %v149 = vld [vmem:[#allocation5 + $0x30] sm:$0xf]
    %v150 = vld [vmem:[#allocation5 + $0x34] sm:$0xf]
    %v151 = vld [vmem:[#allocation5 + $0x38] sm:$0xf]
    %v152 = vld [vmem:[#allocation5 + $0x3c] sm:$0xf]
    %v153 = vld [vmem:[%s4] sm:$0x1]
    %v155 = vperm.slane %v153, 0
    %v173 = vunpack.c.l.b16 %v137
    %v174 = vunpack.c.l.b16 %v138
    %v175 = vunpack.c.l.b16 %v139
    %v176 = vunpack.c.l.b16 %v140
    %v177 = vunpack.c.l.b16 %v141
    %v178 = vunpack.c.l.b16 %v142
    %v179 = vunpack.c.l.b16 %v143
    %v180 = vunpack.c.l.b16 %v144
    %v181 = vunpack.c.l.b16 %v145
    %v182 = vunpack.c.l.b16 %v146
    %v183 = vunpack.c.l.b16 %v147
    %v184 = vunpack.c.l.b16 %v148
    %v185 = vunpack.c.l.b16 %v149
    %v186 = vunpack.c.l.b16 %v150
    %v187 = vunpack.c.l.b16 %v151
    %v188 = vunpack.c.l.b16 %v152
    %v189 = vpack.c.b16 %v174, %v173
    %v190 = vpack.c.b16 %v176, %v175
    %v191 = vpack.c.b16 %v178, %v177
    %v192 = vpack.c.b16 %v180, %v179
    %v193 = vpack.c.b16 %v182, %v181
    %v194 = vpack.c.b16 %v184, %v183
    %v195 = vpack.c.b16 %v186, %v185
    %v196 = vpack.c.b16 %v188, %v187
    %205 = vmatpush.bf16.msra.mxu0 %v196
    %206 = vmatpush.bf16.msra.mxu0 %v195
    %207 = vmatpush.bf16.msra.mxu0 %v194
    %208 = vmatpush.bf16.msra.mxu0 %v193
    %209 = vmatpush.bf16.msra.mxu0 %v192
    %210 = vmatpush.bf16.msra.mxu0 %v191
    %211 = vmatpush.bf16.msra.mxu0 %v190
    %212 = vmatpush.bf16.msra.mxu0 %v189
    %213 = vmatmul.bf16.gmra.mxu0 %v136
    %v214 = vpop.f32.mrf.mxu0
    %v215 = vadd.f32 %v155, %v214
    %v216 = vpop.f32.mrf.mxu0
    %217 = vdwg.mxu0
    %218 = vmax.xlane.f32.xlu0 %v215
    %v219 = vpop.xlane.xlu0 %218
    %v220 = vsub.f32 %v215, %v219
    %v221 = vmul.f32 %v220, 1.442695
    %v222 = vpow.pop %v221
    %223 = vadd.xlane.f32.xlu0 %v222
    %v224 = vpop.xlane.xlu0 %223
    %v225 = vrcp.pop %v224
    %v226 = vmul.f32 %v222, %v225
    %227 = vst [vmem:[#allocation7] sm:$0xff] %v226
    // Predicated region
    $region30: #{_forward_padded.1} parent=1 // pred_check
      _
    $region31: #{_forward_padded.1} parent=1 // pred_check_branch
      %229 = sbr.rel (0) target = $region33
    $region32: #{_forward_padded.1} parent=1 // pred_region
      %231 = vsyncadd [#allocation4], 0
      %s233 = sshll.u32 [#allocation7], 4
      %s234 = int_to_ptr.vmem [resolvable:$true] %s233
      %s235 = sshll.u32 %s5, 4
      %s236 = int_to_ptr.hbm [resolvable:$true] %s235
      %238 = dma.vmem_to_hbm [thread:$0]  %s234, 128, %s236, [#allocation4]
    $region33: #{_forward_padded.1} parent=1 // pred_fallthru
      _
    // Predicated region
    $region34: #{_forward_padded.1} parent=1 // pred_check
      _
    $region35: #{_forward_padded.1} parent=1 // pred_check_branch
      %240 = sbr.rel (0) target = $region37
    $region36: #{_forward_padded.1} parent=1 // pred_region
      %242 = dma.done [#allocation4], 128
    $region37: #{_forward_padded.1} parent=1 // pred_fallthru
      _
    %243 = vsyncpa [#allocation3], 1
    %244 = vsyncpa [#allocation6], 1
    %245 = vsyncpa [#allocation4], 1

</llo_original>
